<compile_context>
chip_gen: v7x
topology: tpu7x:2x2x1
jax: 0.10.0
libtpu: 0.0.40
codegen_flags: <defaults>
</compile_context>

<pallas_src>
import functools

import jax
import jax.numpy as jnp
from jax.experimental import pallas as pl
from jax.experimental.pallas import tpu as pltpu


def _round_up(x, m):
    return -(-x // m) * m


def _vmem_config():
    """Generation-aware (working-set budget, scoped-VMEM limit) in bytes."""
    cap = None
    try:
        cap = getattr(pltpu.get_tpu_info(), "vmem_capacity_bytes", None)
    except Exception:
        cap = None
    if cap is None:
        cap = 64 << 20                      # unknown -> assume the smallest (v7x-class)
    if cap >= (100 << 20):                  # 128 MiB class: v5e / v6e
        return 64 << 20, 100 << 20
    return 20 << 20, 32 << 20               # 64 MiB class (32 MiB scoped): v7x


def _pick_tile_b(B, D, n_pad, x_bytes, w_bytes, out_bytes, budget, min_sublane):
    """Largest batch tile whose VMEM working set fits the budget.

    Accounts for lane padding of the x tile (D rounded up to 128), double-buffered
    x / output tiles, and single-buffered resident weight + bias.
    """
    d_lane = _round_up(D, 128)
    b_cap = _round_up(max(B, 1), min_sublane)
    for cand in (4096, 2048, 1024, 512, 256, 128, 64, 32, 16, 8):
        t = _round_up(min(cand, b_cap), min_sublane)
        cost = (2 * t * d_lane * x_bytes        # x tile, double buffered (streamed as f32)
                + d_lane * n_pad * w_bytes      # resident weight, single buffered
                + 2 * t * n_pad * out_bytes     # output tile, double buffered
                + 2 * n_pad * 4)                # bias
        if cost <= budget:
            return t
    return min_sublane


def _linear_kernel(x_ref, w_ref, b_ref, o_ref, *, matmul_dtype):
    # Per-tile cast on the VPU (free filler under the MXU / HBM bottleneck), MXU matmul with
    # f32 accumulation, bias add fused on the accumulator before the lane-dense store.
    x = x_ref[...].astype(matmul_dtype)
    acc = jnp.dot(x, w_ref[...], preferred_element_type=jnp.float32)
    o_ref[...] = (acc + b_ref[...]).astype(o_ref.dtype)


def linear_classifier_forward(x, w_t, b, *, apply_bn=False, eps=1e-6,
                              matmul_dtype=jnp.bfloat16, out_dtype=jnp.float32,
                              tile_b=None, use_pallas=None):
    """Forward pass of LinearClassifier.

    x:   (B, D) activations.
    w_t: (D, N) = PyTorch fc.weight transposed.
    b:   (N,)   = fc.bias.
    Returns (B, N) in out_dtype (default float32, matching the module).
    """
    B, D = x.shape
    D2, N = w_t.shape
    assert D == D2 and b.shape == (N,)

    xf = x.astype(jnp.float32)
    w_eff = w_t.astype(jnp.float32)
    b_eff = b.astype(jnp.float32)

    if apply_bn:
        # Training-mode BatchNorm1d(affine=False, eps): full-batch biased statistics, folded
        # into W / b so the kernel can tile the batch freely. Single fused pass over x
        # (E[x^2] - mean^2 in f32, clamped >= 0 against catastrophic cancellation).
        # TODO(synk): running_mean / running_var buffer updates are not modeled (forward only).
        mean = jnp.mean(xf, axis=0)                              # (D,)
        ex2 = jnp.mean(jnp.square(xf), axis=0)                   # (D,)
        var = jnp.maximum(ex2 - jnp.square(mean), 0.0)           # (D,), biased
        inv_std = jax.lax.rsqrt(var + eps)
        w_eff = w_eff * inv_std[:, None]
        b_eff = b_eff - mean @ w_eff
        # NOTE: if bf16 precision of the folded weights ever matters, pass matmul_dtype=f32.

    if use_pallas is None:
        use_pallas = (B >= 64) and (B * D >= 16384)
    if not use_pallas:
        # Tiny problems: pallas_call launch + lane padding overhead dominates; plain XLA wins.
        return (xf @ w_eff + b_eff[None, :]).astype(out_dtype)

    # Lane-dense output: pad num_labels up to a multiple of 128; slice back at the end.
    # (For repeated inference with fixed weights and apply_bn=False, w_p / b_p can be
    #  precomputed once by the caller; they are cheap D*n_pad / n_pad arrays.)
    n_pad = _round_up(N, 128)
    w_p = jnp.pad(w_eff, ((0, 0), (0, n_pad - N))).astype(matmul_dtype)
    b_p = jnp.pad(b_eff, (0, n_pad - N)).reshape(1, n_pad).astype(jnp.float32)

    x_bytes = 4                                       # x streams as f32
    w_bytes = jnp.dtype(matmul_dtype).itemsize
    out_bytes = jnp.dtype(out_dtype).itemsize
    min_sublane = 16 if (w_bytes < 4 or out_bytes < 4) else 8
    budget, vmem_limit = _vmem_config()

    if tile_b is None:
        tile_b = _pick_tile_b(B, D, n_pad, x_bytes, w_bytes, out_bytes, budget, min_sublane)
    tile_b = max(min_sublane,
                 _round_up(min(tile_b, _round_up(B, min_sublane)), min_sublane))
    # Guarantee >= 2 grid steps for non-tiny B so both v7x TensorCores get a share
    # (harmless elsewhere: one extra ~0.35 us grid step).
    if B >= 2 * min_sublane and tile_b >= B:
        tile_b = _round_up(pl.cdiv(B, 2), min_sublane)

    grid = (pl.cdiv(B, tile_b),)                      # partial last tile handled by Pallas

    cost = pl.CostEstimate(
        flops=2 * B * D * n_pad,
        transcendentals=0,
        bytes_accessed=B * D * x_bytes + D * n_pad * w_bytes + B * n_pad * out_bytes,
    )
    kernel = functools.partial(_linear_kernel, matmul_dtype=matmul_dtype)

    def _call(single_buffer_resident):
        # Weight / bias have constant index_maps -> single-buffer them to free VMEM
        # for larger batch tiles.
        resident = dict(pipeline_mode=pl.Buffered(1)) if single_buffer_resident else {}
        return pl.pallas_call(
            kernel,
            out_shape=jax.ShapeDtypeStruct((B, n_pad), out_dtype),
            grid=grid,
            in_specs=[
                pl.BlockSpec((tile_b, D), lambda i: (i, 0)),            # stream batch tiles
                pl.BlockSpec((D, n_pad), lambda i: (0, 0), **resident), # resident weight
                pl.BlockSpec((1, n_pad), lambda i: (0, 0), **resident), # resident bias
            ],
            out_specs=pl.BlockSpec((tile_b, n_pad), lambda i: (i, 0)),
            compiler_params=pltpu.CompilerParams(
                dimension_semantics=("parallel",),      # megacore sharding on v7x
                vmem_limit_bytes=vmem_limit,
            ),
            cost_estimate=cost,
        )(xf, w_p, b_p)

    try:
        out = _call(True)
    except Exception:
        # Fall back to default double-buffering if single-buffer pipeline_mode is rejected.
        out = _call(False)

    return out[:, :N]


def init_linear_params(key, input_dim, num_labels):
    """Deterministic nn.Linear-style init: U(-1/sqrt(D), 1/sqrt(D))."""
    kw, kb = jax.random.split(key)
    bound = 1.0 / jnp.sqrt(jnp.float32(input_dim))
    # PyTorch stores weight as (num_labels, input_dim); we keep its transpose (D, N).
    w_t = jax.random.uniform(kw, (input_dim, num_labels), jnp.float32, -bound, bound)
    b = jax.random.uniform(kb, (num_labels,), jnp.float32, -bound, bound)
    return w_t, b


def _reference(x, w_t, b, apply_bn, eps=1e-6):
    x = x.astype(jnp.float32)
    if apply_bn:
        mean = jnp.mean(x, axis=0, keepdims=True)
        var = jnp.mean((x - mean) ** 2, axis=0, keepdims=True)
        x = (x - mean) / jnp.sqrt(var + eps)
    return x @ w_t + b[None, :]


if __name__ == "__main__":
    key = jax.random.PRNGKey(0)
    k_x, k_p, k_x2, k_p2 = jax.random.split(key, 4)

    # --- Small shapes consistent with the module (B=8, input_dim=32, num_labels=8) ---
    B, D, N = 8, 32, 8
    x = jax.random.normal(k_x, (B, D), jnp.float32)
    w_t, b = init_linear_params(k_p, D, N)

    # Force the Pallas path at the small shape (f32 matmul -> tight tolerance).
    out_small = linear_classifier_forward(x, w_t, b, apply_bn=False,
                                          matmul_dtype=jnp.float32, use_pallas=True)
    jax.block_until_ready(out_small)
    ref_small = _reference(x, w_t, b, apply_bn=False)
    assert out_small.shape == (B, N)
    assert jnp.allclose(out_small, ref_small, atol=1e-5, rtol=1e-5)

    out_small_bn = linear_classifier_forward(x, w_t, b, apply_bn=True,
                                             matmul_dtype=jnp.float32, use_pallas=True)
    jax.block_until_ready(out_small_bn)
    ref_small_bn = _reference(x, w_t, b, apply_bn=True)
    assert out_small_bn.shape == (B, N)
    assert jnp.allclose(out_small_bn, ref_small_bn, atol=1e-4, rtol=1e-4)

    # Auto mode at this tiny size takes the XLA fallback; must match the same reference.
    out_auto = linear_classifier_forward(x, w_t, b, apply_bn=True)
    jax.block_until_ready(out_auto)
    assert jnp.allclose(out_auto, ref_small_bn, atol=1e-4, rtol=1e-4)

    # --- Larger case: batch-tiled grid (>=2 steps), partial last tile, lane-padded labels ---
    B2, D2, N2 = 300, 256, 10
    x2 = jax.random.normal(k_x2, (B2, D2), jnp.float32)
    w_t2, b2 = init_linear_params(k_p2, D2, N2)
    ref2 = _reference(x2, w_t2, b2, apply_bn=True)

    out2_f32 = linear_classifier_forward(x2, w_t2, b2, apply_bn=True,
                                         matmul_dtype=jnp.float32)
    jax.block_until_ready(out2_f32)
    assert out2_f32.shape == (B2, N2)
    assert jnp.allclose(out2_f32, ref2, atol=2e-4, rtol=2e-4)

    out2_bf16 = linear_classifier_forward(x2, w_t2, b2, apply_bn=True)  # bf16 matmul, f32 acc
    jax.block_until_ready(out2_bf16)
    assert out2_bf16.shape == (B2, N2)
    assert jnp.allclose(out2_bf16, ref2, atol=5e-2, rtol=5e-2)

    print("KERNEL_OK")
</pallas_src>

<mosaic_0001>
module attributes {stable_mosaic.version = 11 : i64} {
  func.func @_linear_kernel(%arg0: i32, %arg1: memref<8x32xf32, #tpu.memory_space<vmem>>, %arg2: memref<32x128xf32, #tpu.memory_space<vmem>>, %arg3: memref<1x128xf32, #tpu.memory_space<vmem>>, %arg4: memref<8x128xf32, #tpu.memory_space<vmem>>) attributes {dimension_semantics = [#tpu.dimension_semantics<parallel>], iteration_bounds = array<i64: 1>, scalar_prefetch = 0 : i64, scratch_operands = 0 : i64, tpu.core_type = #tpu.core_type<tc>, window_params = [{transform_indices = @transform_0, window_bounds = array<i64: 8, 32>}, {pipeline_mode = #tpu.pipeline_mode<synchronous>, transform_indices = @transform_1, window_bounds = array<i64: 32, 128>}, {pipeline_mode = #tpu.pipeline_mode<synchronous>, transform_indices = @transform_2, window_bounds = array<i64: 1, 128>}, {transform_indices = @transform_3, window_bounds = array<i64: 8, 128>}]} {
    %c0 = arith.constant 0 : index
    %c0_0 = arith.constant 0 : index
    %0 = vector.load %arg1[%c0, %c0_0] : memref<8x32xf32, #tpu.memory_space<vmem>>, vector<8x32xf32>
    %c0_1 = arith.constant 0 : index
    %c0_2 = arith.constant 0 : index
    %1 = vector.load %arg2[%c0_1, %c0_2] : memref<32x128xf32, #tpu.memory_space<vmem>>, vector<32x128xf32>
    %cst = arith.constant dense<0.000000e+00> : vector<8x128xf32>
    %2 = tpu.matmul %0, %1, %cst {dimension_numbers = #tpu.dot_dimension_numbers<[1], [0], [0], [1], [0, 0, 1, 1], [], []>} : vector<8x32xf32>, vector<32x128xf32>, vector<8x128xf32> -> vector<8x128xf32>
    %c0_3 = arith.constant 0 : index
    %c0_4 = arith.constant 0 : index
    %3 = vector.load %arg3[%c0_3, %c0_4] : memref<1x128xf32, #tpu.memory_space<vmem>>, vector<1x128xf32>
    %4 = vector.broadcast %3 : vector<1x128xf32> to vector<8x128xf32>
    %5 = arith.addf %2, %4 : vector<8x128xf32>
    %c0_5 = arith.constant 0 : index
    %c0_6 = arith.constant 0 : index
    %6 = vector.load %arg4[%c0_5, %c0_6] : memref<8x128xf32, #tpu.memory_space<vmem>>, vector<8x128xf32>
    tpu.vector_store %arg4[%c0_5, %c0_6], %5 {strides = array<i32>} : memref<8x128xf32, #tpu.memory_space<vmem>>, vector<8x128xf32>,
    return
  }
  func.func @transform_0(%arg0: i32) -> (i32, i32) {
    %c0_i32 = arith.constant 0 : i32
    %c0_i32_0 = arith.constant 0 : i32
    return %arg0, %c0_i32 : i32, i32
  }
  func.func @transform_1(%arg0: i32) -> (i32, i32) {
    %c0_i32 = arith.constant 0 : i32
    %c0_i32_0 = arith.constant 0 : i32
    %c0_i32_1 = arith.constant 0 : i32
    return %c0_i32, %c0_i32_0 : i32, i32
  }
  func.func @transform_2(%arg0: i32) -> (i32, i32) {
    %c0_i32 = arith.constant 0 : i32
    %c0_i32_0 = arith.constant 0 : i32
    %c0_i32_1 = arith.constant 0 : i32
    return %c0_i32, %c0_i32_0 : i32, i32
  }
  func.func @transform_3(%arg0: i32) -> (i32, i32) {
    %c0_i32 = arith.constant 0 : i32
    %c0_i32_0 = arith.constant 0 : i32
    return %arg0, %c0_i32 : i32, i32
  }
}

module attributes {stable_mosaic.version = 11 : i64} {
  func.func @_linear_kernel(%arg0: i32, %arg1: memref<8x32xf32, #tpu.memory_space<vmem>>, %arg2: memref<32x128xf32, #tpu.memory_space<vmem>>, %arg3: memref<1x128xf32, #tpu.memory_space<vmem>>, %arg4: memref<8x128xf32, #tpu.memory_space<vmem>>) attributes {dimension_semantics = [#tpu.dimension_semantics<parallel>], iteration_bounds = array<i64: 1>, scalar_prefetch = 0 : i64, scratch_operands = 0 : i64, tpu.core_type = #tpu.core_type<tc>, window_params = [{transform_indices = @transform_0, window_bounds = array<i64: 8, 32>}, {pipeline_mode = #tpu.pipeline_mode<synchronous>, transform_indices = @transform_1, window_bounds = array<i64: 32, 128>}, {pipeline_mode = #tpu.pipeline_mode<synchronous>, transform_indices = @transform_2, window_bounds = array<i64: 1, 128>}, {transform_indices = @transform_3, window_bounds = array<i64: 8, 128>}]} {
    %c0 = arith.constant 0 : index
    %c0_0 = arith.constant 0 : index
    %0 = vector.load %arg1[%c0, %c0_0] : memref<8x32xf32, #tpu.memory_space<vmem>>, vector<8x32xf32>
    %c0_1 = arith.constant 0 : index
    %c0_2 = arith.constant 0 : index
    %1 = vector.load %arg2[%c0_1, %c0_2] : memref<32x128xf32, #tpu.memory_space<vmem>>, vector<32x128xf32>
    %cst = arith.constant dense<0.000000e+00> : vector<8x128xf32>
    %2 = tpu.matmul %0, %1, %cst {dimension_numbers = #tpu.dot_dimension_numbers<[1], [0], [0], [1], [0, 0, 1, 1], [], []>} : vector<8x32xf32>, vector<32x128xf32>, vector<8x128xf32> -> vector<8x128xf32>
    %c0_3 = arith.constant 0 : index
    %c0_4 = arith.constant 0 : index
    %3 = vector.load %arg3[%c0_3, %c0_4] : memref<1x128xf32, #tpu.memory_space<vmem>>, vector<1x128xf32>
    %4 = vector.broadcast %3 : vector<1x128xf32> to vector<8x128xf32>
    %5 = arith.addf %2, %4 : vector<8x128xf32>
    %c0_5 = arith.constant 0 : index
    %c0_6 = arith.constant 0 : index
    %6 = vector.load %arg4[%c0_5, %c0_6] : memref<8x128xf32, #tpu.memory_space<vmem>>, vector<8x128xf32>
    tpu.vector_store %arg4[%c0_5, %c0_6], %5 {strides = array<i32>} : memref<8x128xf32, #tpu.memory_space<vmem>>, vector<8x128xf32>,
    return
  }
  func.func @transform_0(%arg0: i32) -> (i32, i32) {
    %c0_i32 = arith.constant 0 : i32
    %c0_i32_0 = arith.constant 0 : i32
    return %arg0, %c0_i32 : i32, i32
  }
  func.func @transform_1(%arg0: i32) -> (i32, i32) {
    %c0_i32 = arith.constant 0 : i32
    %c0_i32_0 = arith.constant 0 : i32
    %c0_i32_1 = arith.constant 0 : i32
    return %c0_i32, %c0_i32_0 : i32, i32
  }
  func.func @transform_2(%arg0: i32) -> (i32, i32) {
    %c0_i32 = arith.constant 0 : i32
    %c0_i32_0 = arith.constant 0 : i32
    %c0_i32_1 = arith.constant 0 : i32
    return %c0_i32, %c0_i32_0 : i32, i32
  }
  func.func @transform_3(%arg0: i32) -> (i32, i32) {
    %c0_i32 = arith.constant 0 : i32
    %c0_i32_0 = arith.constant 0 : i32
    return %arg0, %c0_i32 : i32, i32
  }
}

</mosaic_0001>

<llo_original>
// kernel: tpu_custom_call.1
$region0: #{tpu_custom_call.1}
  #allocation0 [shape = 'u32[]', space=smem, size = 0x4, offset = 0x4, fixed_abs, tag = 'smem constant byte address 0x4 - core index']
  #allocation1 [shape = 'u32[144,128]{1,0:T(1,128)}', space=vmem, size = 0x12000, scoped, tag = 'internal scratch']
  %s0 = inlined_call_operand.hbm [shape: f32[8,32], index: 0, kind: input, shape index: {}]
  %s1 = inlined_call_operand.hbm [shape: f32[32,128], index: 1, kind: input, shape index: {}]
  %s2 = inlined_call_operand.vmem [shape: f32[1,128], index: 2, kind: input, shape index: {}]
  %s3 = inlined_call_operand.hbm [shape: f32[8,128], index: 3, kind: output, shape index: {}]
  %s4 = sld [smem:[#allocation0]]
  $region30: #{tpu_custom_call.1} parent=0
    _
  %s6 = ssub.s32 1, %s4
  %s7 = scalar_select 0, %s6, %s4
  $region1: #{tpu_custom_call.1} parent=0
    #allocation2 [shape = 'u8[4096]{0}', space=vmem, size = 0x1000, scoped, tag = 'input window, operand 0, single buffered']
    #allocation3 [shape = 's32[1]{0}', space=sflag, size = 0x4, scoped, tag = 'scoped memory for tpu_custom_call.1']
    #allocation4 [shape = 's32[1]{0}', space=sflag, size = 0x4, scoped, tag = 'scoped memory for tpu_custom_call.1']
    #allocation5 [shape = 'u8[16384]{0}', space=vmem, size = 0x4000, scoped, tag = 'input window, operand 1, single buffered']
    #allocation6 [shape = 's32[1]{0}', space=sflag, size = 0x4, scoped, tag = 'scoped memory for tpu_custom_call.1']
    #allocation7 [shape = 'u8[4096]{0}', space=vmem, size = 0x1000, scoped, tag = 'output window, operand 0, single buffered']
    %8 = vsyncpa [#allocation3], 0
    %9 = vsyncpa [#allocation6], 0
    %10 = vsyncpa [#allocation4], 0
    // Predicated region
    $region2: #{tpu_custom_call.1} parent=1 // pred_check
      _
    $region3: #{tpu_custom_call.1} parent=1 // pred_check_branch
      %12 = sbr.rel (0) target = $region5
    $region4: #{tpu_custom_call.1} parent=1 // pred_region
      %s14 = ssub.s32 128, 128
      %15 = vsyncadd [#allocation3], %s14
      %s17 = sshll.u32 [#allocation2], 4
      %s18 = int_to_ptr.vmem [resolvable:$true] %s17
      %20 = dma.hbm_to_vmem [thread:$0]  %s0, 128, %s18, [#allocation3]
    $region5: #{tpu_custom_call.1} parent=1 // pred_fallthru
      _
    // Predicated region
    $region6: #{tpu_custom_call.1} parent=1 // pred_check
      _
    $region7: #{tpu_custom_call.1} parent=1 // pred_check_branch
      %22 = sbr.rel (0) target = $region9
    $region8: #{tpu_custom_call.1} parent=1 // pred_region
      %s24 = ssub.s32 512, 512
      %25 = vsyncadd [#allocation6], %s24
      %s26 = sshll.u32 [#allocation5], 4
      %s27 = int_to_ptr.vmem [resolvable:$true] %s26
      %32 = dma.hbm_to_vmem [thread:$0]  %s1, 512, %s27, [#allocation6], 128, 128, 8
    $region9: #{tpu_custom_call.1} parent=1 // pred_fallthru
      _
    // Predicated region
    $region10: #{tpu_custom_call.1} parent=1 // pred_check
      _
    $region11: #{tpu_custom_call.1} parent=1 // pred_check_branch
      %34 = sbr.rel (0) target = $region13
    $region12: #{tpu_custom_call.1} parent=1 // pred_region
      _
    $region13: #{tpu_custom_call.1} parent=1 // pred_fallthru
      _
    // Predicated region
    $region14: #{tpu_custom_call.1} parent=1 // pred_check
      _
    $region15: #{tpu_custom_call.1} parent=1 // pred_check_branch
      %36 = sbr.rel (0) target = $region17
    $region16: #{tpu_custom_call.1} parent=1 // pred_region
      %37 = dma.done [#allocation3], 128
    $region17: #{tpu_custom_call.1} parent=1 // pred_fallthru
      _
    // Predicated region
    $region18: #{tpu_custom_call.1} parent=1 // pred_check
      _
    $region19: #{tpu_custom_call.1} parent=1 // pred_check_branch
      %39 = sbr.rel (0) target = $region21
    $region20: #{tpu_custom_call.1} parent=1 // pred_region
      %40 = dma.done [#allocation6], 512
    $region21: #{tpu_custom_call.1} parent=1 // pred_fallthru
      _
    %v41 = vld [vmem:[#allocation2] sm:$0xff]
    %v42 = vld [vmem:[#allocation5] sm:$0xff]
    %v43 = vld [vmem:[#allocation5 + $0x8] sm:$0xff]
    %v44 = vld [vmem:[#allocation5 + $0x10] sm:$0xff]
    %v45 = vld [vmem:[#allocation5 + $0x18] sm:$0xff]
    %v46 = vld [vmem:[%s2] sm:$0x1]
    %v48 = vlaneseq
    %v49 = vshrl.u32 %v48, 7
    %v50 = vsub.s32 0, %v49
    %v51 = vrot.slane %v46, %v50
    %vm53 = vcmask 261120
    %v55 = vsel %vm53, %v41, 0
    %57 = vmatprep.subr.mxu0 0.0
    %58 = vmatpush1.msra.mxu0 %v42
    %59 = vmatprep.subr.mxu0 0.0
    %60 = vmatpush1.msra.mxu0 %v43
    %61 = vmatprep.subr.mxu0 0.0
    %62 = vmatpush1.msra.mxu0 %v44
    %63 = vmatprep.subr.mxu0 0.0
    %64 = vmatpush1.msra.mxu0 %v45
    %65 = vmatprep.subr.mxu0 0.0
    %66 = vmatpush1.msra.mxu0 0.0
    %67 = vmatprep.subr.mxu0 0.0
    %68 = vmatpush1.msra.mxu0 0.0
    %69 = vmatprep.subr.mxu0 0.0
    %70 = vmatpush1.msra.mxu0 0.0
    %71 = vmatprep.subr.mxu0 0.0
    %72 = vmatpush1.msra.mxu0 0.0
    %73 = vmatprep.subr.mxu0 0.0
    %74 = vmatpush1.msra.mxu0 0.0
    %75 = vmatprep.subr.mxu0 0.0
    %76 = vmatpush1.msra.mxu0 0.0
    %77 = vmatprep.subr.mxu0 0.0
    %78 = vmatpush1.msra.mxu0 0.0
    %79 = vmatprep.subr.mxu0 0.0
    %80 = vmatpush1.msra.mxu0 0.0
    %81 = vmatprep.subr.mxu0 0.0
    %82 = vmatpush1.msra.mxu0 0.0
    %83 = vmatprep.subr.mxu0 0.0
    %84 = vmatpush1.msra.mxu0 0.0
    %85 = vmatprep.subr.mxu0 0.0
    %86 = vmatpush1.msra.mxu0 0.0
    %87 = vmatprep.subr.mxu0 0.0
    %88 = vmatpush1.msra.mxu0 0.0
    %89 = vmatprep.subr.mxu0 0.0
    %90 = vmatpush1.msra.mxu0 0.0
    %91 = vmatprep.subr.mxu0 0.0
    %92 = vmatpush1.msra.mxu0 0.0
    %93 = vmatprep.subr.mxu0 0.0
    %94 = vmatpush1.msra.mxu0 0.0
    %95 = vmatprep.subr.mxu0 0.0
    %96 = vmatpush1.msra.mxu0 0.0
    %97 = vmatprep.subr.mxu0 0.0
    %98 = vmatpush1.msra.mxu0 0.0
    %99 = vmatprep.subr.mxu0 0.0
    %100 = vmatpush1.msra.mxu0 0.0
    %101 = vmatprep.subr.mxu0 0.0
    %102 = vmatpush1.msra.mxu0 0.0
    %103 = vmatprep.subr.mxu0 0.0
    %104 = vmatpush1.msra.mxu0 0.0
    %105 = vmatprep.subr.mxu0 0.0
    %106 = vmatpush1.msra.mxu0 0.0
    %107 = vmatprep.subr.mxu0 0.0
    %108 = vmatpush1.msra.mxu0 0.0
    %109 = vmatprep.subr.mxu0 0.0
    %110 = vmatpush1.msra.mxu0 0.0
    %111 = vmatprep.subr.mxu0 0.0
    %112 = vmatpush1.msra.mxu0 0.0
    %113 = vmatprep.subr.mxu0 0.0
    %114 = vmatpush1.msra.mxu0 0.0
    %115 = vmatprep.subr.mxu0 0.0
    %116 = vmatpush1.msra.mxu0 0.0
    %117 = vmatprep.subr.mxu0 0.0
    %118 = vmatpush1.msra.mxu0 0.0
    %119 = vmatprep.subr.mxu0 0.0
    %120 = vmatpush1.msra.mxu0 0.0
    %121 = vmatprep.mubr.f32.mxu0 0.0
    %122 = vmatmul.mubr.f32.gmra.mrb[0].mxu0 %v55
    %v123 = vpop.f32.mrb[0].mxu0
    %v124 = vadd.f32 %v51, %v123
    %v125 = vpop.f32.mrb[0].mxu0
    %126 = vdwg.mxu0
    %127 = vst [vmem:[#allocation7] sm:$0xff] %v124
    // Predicated region
    $region22: #{tpu_custom_call.1} parent=1 // pred_check
      _
    $region23: #{tpu_custom_call.1} parent=1 // pred_check_branch
      %129 = sbr.rel (0) target = $region25
    $region24: #{tpu_custom_call.1} parent=1 // pred_region
      %s131 = ssub.s32 128, 128
      %132 = vsyncadd [#allocation4], %s131
      %s134 = sshll.u32 [#allocation7], 4
      %s135 = int_to_ptr.vmem [resolvable:$true] %s134
      %137 = dma.vmem_to_hbm [thread:$0]  %s135, 128, %s3, [#allocation4]
    $region25: #{tpu_custom_call.1} parent=1 // pred_fallthru
      _
    // Predicated region
    $region26: #{tpu_custom_call.1} parent=1 // pred_check
      _
    $region27: #{tpu_custom_call.1} parent=1 // pred_check_branch
      %139 = sbr.rel (0) target = $region29
    $region28: #{tpu_custom_call.1} parent=1 // pred_region
      %140 = dma.done [#allocation4], 128
    $region29: #{tpu_custom_call.1} parent=1 // pred_fallthru
      _
    %141 = vsyncpa [#allocation3], 1
    %142 = vsyncpa [#allocation6], 1
    %143 = vsyncpa [#allocation4], 1

// kernel: tpu_custom_call.1
$region0: #{tpu_custom_call.1}
  #allocation0 [shape = 'u32[]', space=smem, size = 0x4, offset = 0x4, fixed_abs, tag = 'smem constant byte address 0x4 - core index']
  #allocation1 [shape = 'u32[144,128]{1,0:T(1,128)}', space=vmem, size = 0x12000, scoped, tag = 'internal scratch']
  %s0 = inlined_call_operand.hbm [shape: f32[8,32], index: 0, kind: input, shape index: {}]
  %s1 = inlined_call_operand.hbm [shape: f32[32,128], index: 1, kind: input, shape index: {}]
  %s2 = inlined_call_operand.vmem [shape: f32[1,128], index: 2, kind: input, shape index: {}]
  %s3 = inlined_call_operand.hbm [shape: f32[8,128], index: 3, kind: output, shape index: {}]
  %s4 = sld [smem:[#allocation0]]
  $region30: #{tpu_custom_call.1} parent=0
    _
  %s6 = ssub.s32 1, %s4
  %s7 = scalar_select 0, %s6, %s4
  $region1: #{tpu_custom_call.1} parent=0
    #allocation2 [shape = 'u8[4096]{0}', space=vmem, size = 0x1000, scoped, tag = 'input window, operand 0, single buffered']
    #allocation3 [shape = 's32[1]{0}', space=sflag, size = 0x4, scoped, tag = 'scoped memory for tpu_custom_call.1']
    #allocation4 [shape = 's32[1]{0}', space=sflag, size = 0x4, scoped, tag = 'scoped memory for tpu_custom_call.1']
    #allocation5 [shape = 'u8[16384]{0}', space=vmem, size = 0x4000, scoped, tag = 'input window, operand 1, single buffered']
    #allocation6 [shape = 's32[1]{0}', space=sflag, size = 0x4, scoped, tag = 'scoped memory for tpu_custom_call.1']
    #allocation7 [shape = 'u8[4096]{0}', space=vmem, size = 0x1000, scoped, tag = 'output window, operand 0, single buffered']
    %8 = vsyncpa [#allocation3], 0
    %9 = vsyncpa [#allocation6], 0
    %10 = vsyncpa [#allocation4], 0
    // Predicated region
    $region2: #{tpu_custom_call.1} parent=1 // pred_check
      _
    $region3: #{tpu_custom_call.1} parent=1 // pred_check_branch
      %12 = sbr.rel (0) target = $region5
    $region4: #{tpu_custom_call.1} parent=1 // pred_region
      %s14 = ssub.s32 128, 128
      %15 = vsyncadd [#allocation3], %s14
      %s17 = sshll.u32 [#allocation2], 4
      %s18 = int_to_ptr.vmem [resolvable:$true] %s17
      %20 = dma.hbm_to_vmem [thread:$0]  %s0, 128, %s18, [#allocation3]
    $region5: #{tpu_custom_call.1} parent=1 // pred_fallthru
      _
    // Predicated region
    $region6: #{tpu_custom_call.1} parent=1 // pred_check
      _
    $region7: #{tpu_custom_call.1} parent=1 // pred_check_branch
      %22 = sbr.rel (0) target = $region9
    $region8: #{tpu_custom_call.1} parent=1 // pred_region
      %s24 = ssub.s32 512, 512
      %25 = vsyncadd [#allocation6], %s24
      %s26 = sshll.u32 [#allocation5], 4
      %s27 = int_to_ptr.vmem [resolvable:$true] %s26
      %32 = dma.hbm_to_vmem [thread:$0]  %s1, 512, %s27, [#allocation6], 128, 128, 8
    $region9: #{tpu_custom_call.1} parent=1 // pred_fallthru
      _
    // Predicated region
    $region10: #{tpu_custom_call.1} parent=1 // pred_check
      _
    $region11: #{tpu_custom_call.1} parent=1 // pred_check_branch
      %34 = sbr.rel (0) target = $region13
    $region12: #{tpu_custom_call.1} parent=1 // pred_region
      _
    $region13: #{tpu_custom_call.1} parent=1 // pred_fallthru
      _
    // Predicated region
    $region14: #{tpu_custom_call.1} parent=1 // pred_check
      _
    $region15: #{tpu_custom_call.1} parent=1 // pred_check_branch
      %36 = sbr.rel (0) target = $region17
    $region16: #{tpu_custom_call.1} parent=1 // pred_region
      %37 = dma.done [#allocation3], 128
    $region17: #{tpu_custom_call.1} parent=1 // pred_fallthru
      _
    // Predicated region
    $region18: #{tpu_custom_call.1} parent=1 // pred_check
      _
    $region19: #{tpu_custom_call.1} parent=1 // pred_check_branch
      %39 = sbr.rel (0) target = $region21
    $region20: #{tpu_custom_call.1} parent=1 // pred_region
      %40 = dma.done [#allocation6], 512
    $region21: #{tpu_custom_call.1} parent=1 // pred_fallthru
      _
    %v41 = vld [vmem:[#allocation2] sm:$0xff]
    %v42 = vld [vmem:[#allocation5] sm:$0xff]
    %v43 = vld [vmem:[#allocation5 + $0x8] sm:$0xff]
    %v44 = vld [vmem:[#allocation5 + $0x10] sm:$0xff]
    %v45 = vld [vmem:[#allocation5 + $0x18] sm:$0xff]
    %v46 = vld [vmem:[%s2] sm:$0x1]
    %v48 = vlaneseq
    %v49 = vshrl.u32 %v48, 7
    %v50 = vsub.s32 0, %v49
    %v51 = vrot.slane %v46, %v50
    %vm53 = vcmask 261120
    %v55 = vsel %vm53, %v41, 0
    %57 = vmatprep.subr.mxu0 0.0
    %58 = vmatpush1.msra.mxu0 %v42
    %59 = vmatprep.subr.mxu0 0.0
    %60 = vmatpush1.msra.mxu0 %v43
    %61 = vmatprep.subr.mxu0 0.0
    %62 = vmatpush1.msra.mxu0 %v44
    %63 = vmatprep.subr.mxu0 0.0
    %64 = vmatpush1.msra.mxu0 %v45
    %65 = vmatprep.subr.mxu0 0.0
    %66 = vmatpush1.msra.mxu0 0.0
    %67 = vmatprep.subr.mxu0 0.0
    %68 = vmatpush1.msra.mxu0 0.0
    %69 = vmatprep.subr.mxu0 0.0
    %70 = vmatpush1.msra.mxu0 0.0
    %71 = vmatprep.subr.mxu0 0.0
    %72 = vmatpush1.msra.mxu0 0.0
    %73 = vmatprep.subr.mxu0 0.0
    %74 = vmatpush1.msra.mxu0 0.0
    %75 = vmatprep.subr.mxu0 0.0
    %76 = vmatpush1.msra.mxu0 0.0
    %77 = vmatprep.subr.mxu0 0.0
    %78 = vmatpush1.msra.mxu0 0.0
    %79 = vmatprep.subr.mxu0 0.0
    %80 = vmatpush1.msra.mxu0 0.0
    %81 = vmatprep.subr.mxu0 0.0
    %82 = vmatpush1.msra.mxu0 0.0
    %83 = vmatprep.subr.mxu0 0.0
    %84 = vmatpush1.msra.mxu0 0.0
    %85 = vmatprep.subr.mxu0 0.0
    %86 = vmatpush1.msra.mxu0 0.0
    %87 = vmatprep.subr.mxu0 0.0
    %88 = vmatpush1.msra.mxu0 0.0
    %89 = vmatprep.subr.mxu0 0.0
    %90 = vmatpush1.msra.mxu0 0.0
    %91 = vmatprep.subr.mxu0 0.0
    %92 = vmatpush1.msra.mxu0 0.0
    %93 = vmatprep.subr.mxu0 0.0
    %94 = vmatpush1.msra.mxu0 0.0
    %95 = vmatprep.subr.mxu0 0.0
    %96 = vmatpush1.msra.mxu0 0.0
    %97 = vmatprep.subr.mxu0 0.0
    %98 = vmatpush1.msra.mxu0 0.0
    %99 = vmatprep.subr.mxu0 0.0
    %100 = vmatpush1.msra.mxu0 0.0
    %101 = vmatprep.subr.mxu0 0.0
    %102 = vmatpush1.msra.mxu0 0.0
    %103 = vmatprep.subr.mxu0 0.0
    %104 = vmatpush1.msra.mxu0 0.0
    %105 = vmatprep.subr.mxu0 0.0
    %106 = vmatpush1.msra.mxu0 0.0
    %107 = vmatprep.subr.mxu0 0.0
    %108 = vmatpush1.msra.mxu0 0.0
    %109 = vmatprep.subr.mxu0 0.0
    %110 = vmatpush1.msra.mxu0 0.0
    %111 = vmatprep.subr.mxu0 0.0
    %112 = vmatpush1.msra.mxu0 0.0
    %113 = vmatprep.subr.mxu0 0.0
    %114 = vmatpush1.msra.mxu0 0.0
    %115 = vmatprep.subr.mxu0 0.0
    %116 = vmatpush1.msra.mxu0 0.0
    %117 = vmatprep.subr.mxu0 0.0
    %118 = vmatpush1.msra.mxu0 0.0
    %119 = vmatprep.subr.mxu0 0.0
    %120 = vmatpush1.msra.mxu0 0.0
    %121 = vmatprep.mubr.f32.mxu0 0.0
    %122 = vmatmul.mubr.f32.gmra.mrb[0].mxu0 %v55
    %v123 = vpop.f32.mrb[0].mxu0
    %v124 = vadd.f32 %v51, %v123
    %v125 = vpop.f32.mrb[0].mxu0
    %126 = vdwg.mxu0
    %127 = vst [vmem:[#allocation7] sm:$0xff] %v124
    // Predicated region
    $region22: #{tpu_custom_call.1} parent=1 // pred_check
      _
    $region23: #{tpu_custom_call.1} parent=1 // pred_check_branch
      %129 = sbr.rel (0) target = $region25
    $region24: #{tpu_custom_call.1} parent=1 // pred_region
      %s131 = ssub.s32 128, 128
      %132 = vsyncadd [#allocation4], %s131
      %s134 = sshll.u32 [#allocation7], 4
      %s135 = int_to_ptr.vmem [resolvable:$true] %s134
      %137 = dma.vmem_to_hbm [thread:$0]  %s135, 128, %s3, [#allocation4]
    $region25: #{tpu_custom_call.1} parent=1 // pred_fallthru
      _
    // Predicated region
    $region26: #{tpu_custom_call.1} parent=1 // pred_check
      _
    $region27: #{tpu_custom_call.1} parent=1 // pred_check_branch
      %139 = sbr.rel (0) target = $region29
    $region28: #{tpu_custom_call.1} parent=1 // pred_region
      %140 = dma.done [#allocation4], 128
    $region29: #{tpu_custom_call.1} parent=1 // pred_fallthru
      _
    %141 = vsyncpa [#allocation3], 1
    %142 = vsyncpa [#allocation6], 1
    %143 = vsyncpa [#allocation4], 1

</llo_original>
